<compile_context>
chip_gen: v7x
topology: tpu7x:2x2x1
jax: 0.10.0
libtpu: 0.0.40
codegen_flags: <defaults>
</compile_context>

<pallas_src>
import jax
import jax.numpy as jnp
from jax.experimental import pallas as pl
from jax.experimental.pallas import tpu as pltpu


def _round_up(n, m):
    return ((n + m - 1) // m) * m


def routing_mlp_kernel(x_ref, w1_ref, b1_ref, w2_ref, b2_ref, w3_ref, b3_ref, o_ref):
    """Whole MLP + softmax for one batch tile, entirely in VMEM.

    MXU operands are bf16; accumulation, ReLU and softmax are f32.  The final
    layer is padded to 128 lanes (padded bias = -1e30 so padded columns
    contribute ~0 to the softmax), but only the real d_out columns are stored.
    """
    d_out = o_ref.shape[-1]                       # real (unpadded) output width

    x = x_ref[...].astype(jnp.bfloat16)           # (tile, d_in) f32 -> bf16 in-kernel

    # Hidden layer 1: Linear + ReLU (f32 accumulate, back to bf16 for the MXU)
    h1 = jnp.dot(x, w1_ref[...], preferred_element_type=jnp.float32) + b1_ref[...]
    h1 = jnp.maximum(h1, 0.0).astype(jnp.bfloat16)

    # Hidden layer 2: Linear + ReLU
    h2 = jnp.dot(h1, w2_ref[...], preferred_element_type=jnp.float32) + b2_ref[...]
    h2 = jnp.maximum(h2, 0.0).astype(jnp.bfloat16)

    # Output layer: Linear + softmax over the (128-lane padded) feature axis.
    # Padded columns carry bias -1e30 -> exp underflows to 0, so the softmax
    # over the real columns is unchanged.
    logits = jnp.dot(h2, w3_ref[...], preferred_element_type=jnp.float32) + b3_ref[...]
    m = jnp.max(logits, axis=-1, keepdims=True)
    e = jnp.exp(logits - m)
    s = jnp.sum(e, axis=-1, keepdims=True)
    probs = e * pl.reciprocal(s, approx=True)     # EUP; rows sum to 1 within ~1e-4

    # Store only the real d_out columns (masked vst) — padded lanes never hit HBM.
    o_ref[...] = probs[:, :d_out]


def routing_model_forward(x, params, *, batch_tile=2048):
    """Pallas wrapper: large batch tiles, unpadded f32 output, resident weights."""
    w1, b1, w2, b2, w3, b3 = params
    B, d_in = x.shape
    h1 = w1.shape[1]
    h2d = w2.shape[1]
    d_out = w3.shape[1]

    # --- Pad the final layer to 128 lanes for the in-kernel softmax only. ---
    d_pad = _round_up(d_out, 128)
    if d_pad != d_out:
        w3 = jnp.pad(w3, ((0, 0), (0, d_pad - d_out)))                          # zero weights
        b3 = jnp.pad(b3, ((0, 0), (0, d_pad - d_out)), constant_values=-1e30)   # kill padded logits

    # --- Batch tiling: large MXU-aligned tile, >=2 parallel steps for big B (v7x). ---
    tile = min(batch_tile, _round_up(B, 128))
    tile = _round_up(tile, 128)
    if B > 128:
        # Cap the tile so the grid has at least 2 steps -> both v7x TensorCores work.
        tile = min(tile, _round_up((B + 1) // 2, 128))
    B_pad = _round_up(B, tile)
    if B_pad != B:
        x = jnp.pad(x, ((0, B_pad - B), (0, 0)))
    grid = (B_pad // tile,)

    # bf16 weights for the MXU; biases stay f32 (added to the f32 accumulators).
    w1b = w1.astype(jnp.bfloat16)
    w2b = w2.astype(jnp.bfloat16)
    w3b = w3.astype(jnp.bfloat16)

    # Advisory cost estimate (real output bytes, not the padded width).
    flops = 2 * B_pad * (d_in * h1 + h1 * h2d + h2d * d_pad)
    bytes_accessed = (
        B_pad * d_in * x.dtype.itemsize                      # x (f32)
        + B_pad * d_out * 4                                  # output (f32, unpadded)
        + (d_in * h1 + h1 * h2d + h2d * d_pad) * 2           # weights (bf16)
        + (h1 + h2d + d_pad) * 4                             # biases (f32)
    )
    cost = pl.CostEstimate(
        flops=flops, transcendentals=B_pad * d_pad, bytes_accessed=bytes_accessed
    )

    out = pl.pallas_call(
        routing_mlp_kernel,
        out_shape=jax.ShapeDtypeStruct((B_pad, d_out), jnp.float32),
        grid=grid,
        in_specs=[
            pl.BlockSpec((tile, d_in), lambda i: (i, 0)),   # x tile (f32; cast in-kernel)
            pl.BlockSpec(w1b.shape, lambda i: (0, 0)),      # W1 (d_in, h1), resident
            pl.BlockSpec(b1.shape, lambda i: (0, 0)),       # b1 (1, h1)
            pl.BlockSpec(w2b.shape, lambda i: (0, 0)),      # W2 (h1, h2)
            pl.BlockSpec(b2.shape, lambda i: (0, 0)),       # b2 (1, h2)
            pl.BlockSpec(w3b.shape, lambda i: (0, 0)),      # W3 (h2, 128-padded out)
            pl.BlockSpec(b3.shape, lambda i: (0, 0)),       # b3 (1, 128-padded out)
        ],
        out_specs=pl.BlockSpec((tile, d_out), lambda i: (i, 0)),   # unpadded, f32
        compiler_params=pltpu.CompilerParams(
            dimension_semantics=("parallel",),   # batch axis -> megacore / 2 TCs
            # vmem_limit_bytes only needs raising if batch_tile is pushed past ~4096
            # (tile=2048 keeps total VMEM footprint at ~5 MiB, under every default).
        ),
        cost_estimate=cost,
    )(x, w1b, b1, w2b, b2, w3b, b3)

    # Only batch padding remains to strip; the lane padding never left the kernel.
    return out[:B]


def init_params(key, num_models, hidden_sizes=(128, 64)):
    """Deterministic PyTorch-Linear-style init (uniform +-1/sqrt(fan_in))."""
    layer_sizes = [num_models + 2] + list(hidden_sizes) + [num_models + 1]
    params = []
    for i in range(len(layer_sizes) - 1):
        fan_in, fan_out = layer_sizes[i], layer_sizes[i + 1]
        key, kw, kb = jax.random.split(key, 3)
        bound = 1.0 / jnp.sqrt(float(fan_in))
        # stored as (in, out) so the kernel does x @ W
        w = jax.random.uniform(kw, (fan_in, fan_out), jnp.float32, -bound, bound)
        b = jax.random.uniform(kb, (1, fan_out), jnp.float32, -bound, bound)
        params.extend([w, b])
    return tuple(params)


def routing_model_ref(x, params):
    """Pure-JAX f32 reference for correctness checking."""
    w1, b1, w2, b2, w3, b3 = params
    h1 = jnp.maximum(x @ w1 + b1, 0.0)
    h2 = jnp.maximum(h1 @ w2 + b2, 0.0)
    logits = h2 @ w3 + b3
    return jax.nn.softmax(logits, axis=1)


if __name__ == "__main__":
    num_models = 6          # input dim = num_models + 2 = 8, output dim = 7
    hidden_sizes = (128, 64)

    key = jax.random.PRNGKey(0)
    kx, kx2, kp = jax.random.split(key, 3)
    params = init_params(kp, num_models, hidden_sizes)

    # --- small batch: single grid step, exercises batch padding + masked store ---
    batch = 16
    x = jax.random.normal(kx, (batch, num_models + 2), jnp.float32)
    out = jax.block_until_ready(routing_model_forward(x, params))
    ref = routing_model_ref(x, params)
    assert out.shape == (batch, num_models + 1)
    # bf16 MXU operands + approx reciprocal -> loose-but-meaningful tolerance.
    assert jnp.allclose(out, ref, atol=3e-2, rtol=0.0), "mismatch vs JAX reference (small batch)"
    assert jnp.allclose(jnp.sum(out, axis=1), 1.0, atol=1e-2)

    # --- larger batch: >= 2 parallel grid steps (v7x dual-TC path) + padding ---
    batch2 = 300
    x2 = jax.random.normal(kx2, (batch2, num_models + 2), jnp.float32)
    out2 = jax.block_until_ready(routing_model_forward(x2, params))
    ref2 = routing_model_ref(x2, params)
    assert out2.shape == (batch2, num_models + 1)
    assert jnp.allclose(out2, ref2, atol=3e-2, rtol=0.0), "mismatch vs JAX reference (multi-tile)"
    assert jnp.allclose(jnp.sum(out2, axis=1), 1.0, atol=1e-2)

    print("KERNEL_OK")
</pallas_src>

<mosaic_0001>
module attributes {stable_mosaic.version = 11 : i64} {
  func.func @routing_mlp_kernel(%arg0: i32, %arg1: memref<128x8xf32, #tpu.memory_space<vmem>>, %arg2: memref<8x128xbf16, #tpu.memory_space<vmem>>, %arg3: memref<1x128xf32, #tpu.memory_space<vmem>>, %arg4: memref<128x64xbf16, #tpu.memory_space<vmem>>, %arg5: memref<1x64xf32, #tpu.memory_space<vmem>>, %arg6: memref<64x128xbf16, #tpu.memory_space<vmem>>, %arg7: memref<1x128xf32, #tpu.memory_space<vmem>>, %arg8: memref<128x7xf32, #tpu.memory_space<vmem>>) attributes {dimension_semantics = [#tpu.dimension_semantics<parallel>], iteration_bounds = array<i64: 1>, scalar_prefetch = 0 : i64, scratch_operands = 0 : i64, tpu.core_type = #tpu.core_type<tc>, window_params = [{transform_indices = @transform_0, window_bounds = array<i64: 128, 8>}, {pipeline_mode = #tpu.pipeline_mode<synchronous>, transform_indices = @transform_1, window_bounds = array<i64: 8, 128>}, {pipeline_mode = #tpu.pipeline_mode<synchronous>, transform_indices = @transform_2, window_bounds = array<i64: 1, 128>}, {pipeline_mode = #tpu.pipeline_mode<synchronous>, transform_indices = @transform_3, window_bounds = array<i64: 128, 64>}, {pipeline_mode = #tpu.pipeline_mode<synchronous>, transform_indices = @transform_4, window_bounds = array<i64: 1, 64>}, {pipeline_mode = #tpu.pipeline_mode<synchronous>, transform_indices = @transform_5, window_bounds = array<i64: 64, 128>}, {pipeline_mode = #tpu.pipeline_mode<synchronous>, transform_indices = @transform_6, window_bounds = array<i64: 1, 128>}, {transform_indices = @transform_7, window_bounds = array<i64: 128, 7>}]} {
    %c0 = arith.constant 0 : index
    %c0_0 = arith.constant 0 : index
    %0 = vector.load %arg1[%c0, %c0_0] : memref<128x8xf32, #tpu.memory_space<vmem>>, vector<128x8xf32>
    %1 = arith.truncf %0 : vector<128x8xf32> to vector<128x8xbf16>
    %c0_1 = arith.constant 0 : index
    %c0_2 = arith.constant 0 : index
    %2 = vector.load %arg2[%c0_1, %c0_2] : memref<8x128xbf16, #tpu.memory_space<vmem>>, vector<8x128xbf16>
    %cst = arith.constant dense<0.000000e+00> : vector<128x128xf32>
    %3 = tpu.matmul %1, %2, %cst {dimension_numbers = #tpu.dot_dimension_numbers<[1], [0], [0], [1], [0, 0, 1, 1], [], []>} : vector<128x8xbf16>, vector<8x128xbf16>, vector<128x128xf32> -> vector<128x128xf32>
    %c0_3 = arith.constant 0 : index
    %c0_4 = arith.constant 0 : index
    %4 = vector.load %arg3[%c0_3, %c0_4] : memref<1x128xf32, #tpu.memory_space<vmem>>, vector<1x128xf32>
    %5 = vector.broadcast %4 : vector<1x128xf32> to vector<128x128xf32>
    %6 = arith.addf %3, %5 : vector<128x128xf32>
    %cst_5 = arith.constant 0.000000e+00 : f32
    %7 = vector.broadcast %cst_5 : f32 to vector<128x128xf32>
    %8 = arith.maximumf %6, %7 : vector<128x128xf32>
    %9 = arith.truncf %8 : vector<128x128xf32> to vector<128x128xbf16>
    %c0_6 = arith.constant 0 : index
    %c0_7 = arith.constant 0 : index
    %10 = vector.load %arg4[%c0_6, %c0_7] : memref<128x64xbf16, #tpu.memory_space<vmem>>, vector<128x64xbf16>
    %cst_8 = arith.constant dense<0.000000e+00> : vector<128x64xf32>
    %11 = tpu.matmul %9, %10, %cst_8 {dimension_numbers = #tpu.dot_dimension_numbers<[1], [0], [0], [1], [0, 0, 1, 1], [], []>} : vector<128x128xbf16>, vector<128x64xbf16>, vector<128x64xf32> -> vector<128x64xf32>
    %c0_9 = arith.constant 0 : index
    %c0_10 = arith.constant 0 : index
    %12 = vector.load %arg5[%c0_9, %c0_10] : memref<1x64xf32, #tpu.memory_space<vmem>>, vector<1x64xf32>
    %13 = vector.broadcast %12 : vector<1x64xf32> to vector<128x64xf32>
    %14 = arith.addf %11, %13 : vector<128x64xf32>
    %cst_11 = arith.constant 0.000000e+00 : f32
    %15 = vector.broadcast %cst_11 : f32 to vector<128x64xf32>
    %16 = arith.maximumf %14, %15 : vector<128x64xf32>
    %17 = arith.truncf %16 : vector<128x64xf32> to vector<128x64xbf16>
    %c0_12 = arith.constant 0 : index
    %c0_13 = arith.constant 0 : index
    %18 = vector.load %arg6[%c0_12, %c0_13] : memref<64x128xbf16, #tpu.memory_space<vmem>>, vector<64x128xbf16>
    %cst_14 = arith.constant dense<0.000000e+00> : vector<128x128xf32>
    %19 = tpu.matmul %17, %18, %cst_14 {dimension_numbers = #tpu.dot_dimension_numbers<[1], [0], [0], [1], [0, 0, 1, 1], [], []>} : vector<128x64xbf16>, vector<64x128xbf16>, vector<128x128xf32> -> vector<128x128xf32>
    %c0_15 = arith.constant 0 : index
    %c0_16 = arith.constant 0 : index
    %20 = vector.load %arg7[%c0_15, %c0_16] : memref<1x128xf32, #tpu.memory_space<vmem>>, vector<1x128xf32>
    %21 = vector.broadcast %20 : vector<1x128xf32> to vector<128x128xf32>
    %22 = arith.addf %19, %21 : vector<128x128xf32>
    %cst_17 = arith.constant dense<0xFF800000> : vector<128xf32>
    %23 = vector.multi_reduction <maximumf>, %22, %cst_17 [1] : vector<128x128xf32> to vector<128xf32>
    %24 = vector.shape_cast %23 : vector<128xf32> to vector<128x1xf32>
    %25 = vector.broadcast %24 : vector<128x1xf32> to vector<128x128xf32>
    %26 = arith.subf %22, %25 : vector<128x128xf32>
    %27 = math.exp %26 : vector<128x128xf32>
    %cst_18 = arith.constant dense<0.000000e+00> : vector<128xf32>
    %28 = vector.multi_reduction <add>, %27, %cst_18 [1] : vector<128x128xf32> to vector<128xf32>
    %29 = vector.shape_cast %28 : vector<128xf32> to vector<128x1xf32>
    %30 = tpu.reciprocal %29 {approx = true} : vector<128x1xf32> -> vector<128x1xf32>
    %31 = vector.broadcast %30 : vector<128x1xf32> to vector<128x128xf32>
    %32 = arith.mulf %27, %31 : vector<128x128xf32>
    %33 = vector.extract_strided_slice %32 {offsets = [0, 0], sizes = [128, 7], strides = [1, 1]} : vector<128x128xf32> to vector<128x7xf32>
    %c0_19 = arith.constant 0 : index
    %c0_20 = arith.constant 0 : index
    %34 = vector.load %arg8[%c0_19, %c0_20] : memref<128x7xf32, #tpu.memory_space<vmem>>, vector<128x7xf32>
    tpu.vector_store %arg8[%c0_19, %c0_20], %33 {strides = array<i32>} : memref<128x7xf32, #tpu.memory_space<vmem>>, vector<128x7xf32>,
    return
  }
  func.func @transform_0(%arg0: i32) -> (i32, i32) {
    %c0_i32 = arith.constant 0 : i32
    %c0_i32_0 = arith.constant 0 : i32
    return %arg0, %c0_i32 : i32, i32
  }
  func.func @transform_1(%arg0: i32) -> (i32, i32) {
    %c0_i32 = arith.constant 0 : i32
    %c0_i32_0 = arith.constant 0 : i32
    %c0_i32_1 = arith.constant 0 : i32
    return %c0_i32, %c0_i32_0 : i32, i32
  }
  func.func @transform_2(%arg0: i32) -> (i32, i32) {
    %c0_i32 = arith.constant 0 : i32
    %c0_i32_0 = arith.constant 0 : i32
    %c0_i32_1 = arith.constant 0 : i32
    return %c0_i32, %c0_i32_0 : i32, i32
  }
  func.func @transform_3(%arg0: i32) -> (i32, i32) {
    %c0_i32 = arith.constant 0 : i32
    %c0_i32_0 = arith.constant 0 : i32
    %c0_i32_1 = arith.constant 0 : i32
    return %c0_i32, %c0_i32_0 : i32, i32
  }
  func.func @transform_4(%arg0: i32) -> (i32, i32) {
    %c0_i32 = arith.constant 0 : i32
    %c0_i32_0 = arith.constant 0 : i32
    %c0_i32_1 = arith.constant 0 : i32
    return %c0_i32, %c0_i32_0 : i32, i32
  }
  func.func @transform_5(%arg0: i32) -> (i32, i32) {
    %c0_i32 = arith.constant 0 : i32
    %c0_i32_0 = arith.constant 0 : i32
    %c0_i32_1 = arith.constant 0 : i32
    return %c0_i32, %c0_i32_0 : i32, i32
  }
  func.func @transform_6(%arg0: i32) -> (i32, i32) {
    %c0_i32 = arith.constant 0 : i32
    %c0_i32_0 = arith.constant 0 : i32
    %c0_i32_1 = arith.constant 0 : i32
    return %c0_i32, %c0_i32_0 : i32, i32
  }
  func.func @transform_7(%arg0: i32) -> (i32, i32) {
    %c0_i32 = arith.constant 0 : i32
    %c0_i32_0 = arith.constant 0 : i32
    return %arg0, %c0_i32 : i32, i32
  }
}

</mosaic_0001>

<llo_original>
// kernel: tpu_custom_call.1
$region0: #{tpu_custom_call.1}
  #allocation0 [shape = 'u32[]', space=smem, size = 0x4, offset = 0x4, fixed_abs, tag = 'smem constant byte address 0x4 - core index']
  #allocation1 [shape = 'u32[144,128]{1,0:T(1,128)}', space=vmem, size = 0x12000, scoped, tag = 'internal scratch']
  %s0 = inlined_call_operand.vmem [shape: f32[128,8], index: 0, kind: input, shape index: {}]
  %s1 = inlined_call_operand.vmem [shape: bf16[8,128], index: 1, kind: input, shape index: {}]
  %s2 = inlined_call_operand.vmem [shape: f32[1,128], index: 2, kind: input, shape index: {}]
  %s3 = inlined_call_operand.vmem [shape: bf16[128,64], index: 3, kind: input, shape index: {}]
  %s4 = inlined_call_operand.vmem [shape: f32[1,64], index: 4, kind: input, shape index: {}]
  %s5 = inlined_call_operand.vmem [shape: bf16[64,128], index: 5, kind: input, shape index: {}]
  %s6 = inlined_call_operand.vmem [shape: f32[1,128], index: 6, kind: input, shape index: {}]
  %s7 = inlined_call_operand.vmem [shape: f32[128,7], index: 7, kind: output, shape index: {}]
  %s8 = sld [smem:[#allocation0]]
  $region38: #{tpu_custom_call.1} parent=0
    _
  %s10 = ssub.s32 1, %s8
  %s11 = scalar_select 0, %s10, %s8
  // Predicated region
  $region2: #{tpu_custom_call.1} parent=0 // pred_check
    _
  $region3: #{tpu_custom_call.1} parent=0 // pred_check_branch
    %13 = sbr.rel (0) target = $region5
  $region4: #{tpu_custom_call.1} parent=0 // pred_region
    _
  $region5: #{tpu_custom_call.1} parent=0 // pred_fallthru
    _
  // Predicated region
  $region6: #{tpu_custom_call.1} parent=0 // pred_check
    _
  $region7: #{tpu_custom_call.1} parent=0 // pred_check_branch
    %15 = sbr.rel (0) target = $region9
  $region8: #{tpu_custom_call.1} parent=0 // pred_region
    _
  $region9: #{tpu_custom_call.1} parent=0 // pred_fallthru
    _
  // Predicated region
  $region10: #{tpu_custom_call.1} parent=0 // pred_check
    _
  $region11: #{tpu_custom_call.1} parent=0 // pred_check_branch
    %17 = sbr.rel (0) target = $region13
  $region12: #{tpu_custom_call.1} parent=0 // pred_region
    _
  $region13: #{tpu_custom_call.1} parent=0 // pred_fallthru
    _
  // Predicated region
  $region14: #{tpu_custom_call.1} parent=0 // pred_check
    _
  $region15: #{tpu_custom_call.1} parent=0 // pred_check_branch
    %19 = sbr.rel (0) target = $region17
  $region16: #{tpu_custom_call.1} parent=0 // pred_region
    _
  $region17: #{tpu_custom_call.1} parent=0 // pred_fallthru
    _
  // Predicated region
  $region18: #{tpu_custom_call.1} parent=0 // pred_check
    _
  $region19: #{tpu_custom_call.1} parent=0 // pred_check_branch
    %21 = sbr.rel (0) target = $region21
  $region20: #{tpu_custom_call.1} parent=0 // pred_region
    _
  $region21: #{tpu_custom_call.1} parent=0 // pred_fallthru
    _
  // Predicated region
  $region22: #{tpu_custom_call.1} parent=0 // pred_check
    _
  $region23: #{tpu_custom_call.1} parent=0 // pred_check_branch
    %23 = sbr.rel (0) target = $region25
  $region24: #{tpu_custom_call.1} parent=0 // pred_region
    _
  $region25: #{tpu_custom_call.1} parent=0 // pred_fallthru
    _
  // Predicated region
  $region26: #{tpu_custom_call.1} parent=0 // pred_check
    _
  $region27: #{tpu_custom_call.1} parent=0 // pred_check_branch
    %25 = sbr.rel (0) target = $region29
  $region28: #{tpu_custom_call.1} parent=0 // pred_region
    _
  $region29: #{tpu_custom_call.1} parent=0 // pred_fallthru
    _
  %v27 = vld [vmem:[%s0] sm:$0xff]
  %v28 = vld [vmem:[%s0 + $0x8] sm:$0xff]
  %v29 = vld [vmem:[%s0 + $0x10] sm:$0xff]
  %v30 = vld [vmem:[%s0 + $0x18] sm:$0xff]
  %v31 = vld [vmem:[%s0 + $0x20] sm:$0xff]
  %v32 = vld [vmem:[%s0 + $0x28] sm:$0xff]
  %v33 = vld [vmem:[%s0 + $0x30] sm:$0xff]
  %v34 = vld [vmem:[%s0 + $0x38] sm:$0xff]
  %v35 = vld [vmem:[%s0 + $0x40] sm:$0xff]
  %v36 = vld [vmem:[%s0 + $0x48] sm:$0xff]
  %v37 = vld [vmem:[%s0 + $0x50] sm:$0xff]
  %v38 = vld [vmem:[%s0 + $0x58] sm:$0xff]
  %v39 = vld [vmem:[%s0 + $0x60] sm:$0xff]
  %v40 = vld [vmem:[%s0 + $0x68] sm:$0xff]
  %v41 = vld [vmem:[%s0 + $0x70] sm:$0xff]
  %v42 = vld [vmem:[%s0 + $0x78] sm:$0xff]
  %v43 = vpack.c.bf16 %v28, %v27
  %v44 = vpack.c.bf16 %v30, %v29
  %v45 = vpack.c.bf16 %v32, %v31
  %v46 = vpack.c.bf16 %v34, %v33
  %v47 = vpack.c.bf16 %v36, %v35
  %v48 = vpack.c.bf16 %v38, %v37
  %v49 = vpack.c.bf16 %v40, %v39
  %v50 = vpack.c.bf16 %v42, %v41
  %v51 = vld [vmem:[%s1] sm:$0xf]
  %v52 = vld [vmem:[%s2] sm:$0x1]
  %v54 = vlaneseq
  %v55 = vshrl.u32 %v54, 7
  %v56 = vsub.s32 0, %v55
  %v57 = vrot.slane %v52, %v56
  %vm59 = vcmask 64512
  %v61 = vsel %vm59, %v43, 0
  %v64 = vsel %vm59, %v44, 0
  %v67 = vsel %vm59, %v45, 0
  %v70 = vsel %vm59, %v46, 0
  %v73 = vsel %vm59, %v47, 0
  %v76 = vsel %vm59, %v48, 0
  %v79 = vsel %vm59, %v49, 0
  %v82 = vsel %vm59, %v50, 0
  %vm84 = vcmask 1043456
  %v86 = vsel %vm84, %v51, 0
  %88 = vmatprep.subr.bf16.mxu0 0
  %89 = vmatpush1.bf16.msra.mxu0 %v86
  %90 = vmatprep.subr.bf16.mxu0 0
  %91 = vmatpush1.bf16.msra.mxu0 0
  %92 = vmatprep.subr.bf16.mxu0 0
  %93 = vmatpush1.bf16.msra.mxu0 0
  %94 = vmatprep.subr.bf16.mxu0 0
  %95 = vmatpush1.bf16.msra.mxu0 0
  %96 = vmatprep.subr.bf16.mxu0 0
  %97 = vmatpush1.bf16.msra.mxu0 0
  %98 = vmatprep.subr.bf16.mxu0 0
  %99 = vmatpush1.bf16.msra.mxu0 0
  %100 = vmatprep.subr.bf16.mxu0 0
  %101 = vmatpush1.bf16.msra.mxu0 0
  %102 = vmatprep.subr.bf16.mxu0 0
  %103 = vmatpush1.bf16.msra.mxu0 0
  %104 = vmatprep.subr.bf16.mxu0 0
  %105 = vmatpush1.bf16.msra.mxu0 0
  %106 = vmatprep.subr.bf16.mxu0 0
  %107 = vmatpush1.bf16.msra.mxu0 0
  %108 = vmatprep.subr.bf16.mxu0 0
  %109 = vmatpush1.bf16.msra.mxu0 0
  %110 = vmatprep.subr.bf16.mxu0 0
  %111 = vmatpush1.bf16.msra.mxu0 0
  %112 = vmatprep.subr.bf16.mxu0 0
  %113 = vmatpush1.bf16.msra.mxu0 0
  %114 = vmatprep.subr.bf16.mxu0 0
  %115 = vmatpush1.bf16.msra.mxu0 0
  %116 = vmatprep.subr.bf16.mxu0 0
  %117 = vmatpush1.bf16.msra.mxu0 0
  %118 = vmatprep.subr.bf16.mxu0 0
  %119 = vmatpush1.bf16.msra.mxu0 0
  %120 = vmatprep.mubr.bf16.mxu0 0
  %121 = vmatmul.mubr.bf16.gmra.mrb[0].mxu0 %v61
  %v122 = vpop.f32.mrb[0].mxu0
  %v123 = vadd.f32 %v57, %v122
  %v124 = vpop.f32.mrb[0].mxu0
  %v125 = vpop.f32.mrb[0].mxu0
  %v126 = vadd.f32 %v57, %v125
  %v127 = vpop.f32.mrb[0].mxu0
  %128 = vmatprep.mubr.bf16.mxu0 0
  %129 = vmatmul.mubr.bf16.gmra.mrb[0].mxu0 %v64
  %v130 = vpop.f32.mrb[0].mxu0
  %v131 = vadd.f32 %v57, %v130
  %v132 = vpop.f32.mrb[0].mxu0
  %v133 = vpop.f32.mrb[0].mxu0
  %v134 = vadd.f32 %v57, %v133
  %v135 = vpop.f32.mrb[0].mxu0
  %136 = vmatprep.mubr.bf16.mxu0 0
  %137 = vmatmul.mubr.bf16.gmra.mrb[0].mxu0 %v67
  %v138 = vpop.f32.mrb[0].mxu0
  %v139 = vadd.f32 %v57, %v138
  %v140 = vpop.f32.mrb[0].mxu0
  %v141 = vpop.f32.mrb[0].mxu0
  %v142 = vadd.f32 %v57, %v141
  %v143 = vpop.f32.mrb[0].mxu0
  %144 = vmatprep.mubr.bf16.mxu0 0
  %145 = vmatmul.mubr.bf16.gmra.mrb[0].mxu0 %v70
  %v146 = vpop.f32.mrb[0].mxu0
  %v147 = vadd.f32 %v57, %v146
  %v148 = vpop.f32.mrb[0].mxu0
  %v149 = vpop.f32.mrb[0].mxu0
  %v150 = vadd.f32 %v57, %v149
  %v151 = vpop.f32.mrb[0].mxu0
  %152 = vmatprep.mubr.bf16.mxu0 0
  %153 = vmatmul.mubr.bf16.gmra.mrb[0].mxu0 %v73
  %v154 = vpop.f32.mrb[0].mxu0
  %v155 = vadd.f32 %v57, %v154
  %v156 = vpop.f32.mrb[0].mxu0
  %v157 = vpop.f32.mrb[0].mxu0
  %v158 = vadd.f32 %v57, %v157
  %v159 = vpop.f32.mrb[0].mxu0
  %160 = vmatprep.mubr.bf16.mxu0 0
  %161 = vmatmul.mubr.bf16.gmra.mrb[0].mxu0 %v76
  %v162 = vpop.f32.mrb[0].mxu0
  %v163 = vadd.f32 %v57, %v162
  %v164 = vpop.f32.mrb[0].mxu0
  %v165 = vpop.f32.mrb[0].mxu0
  %v166 = vadd.f32 %v57, %v165
  %v167 = vpop.f32.mrb[0].mxu0
  %168 = vmatprep.mubr.bf16.mxu0 0
  %169 = vmatmul.mubr.bf16.gmra.mrb[0].mxu0 %v79
  %v170 = vpop.f32.mrb[0].mxu0
  %v171 = vadd.f32 %v57, %v170
  %v172 = vpop.f32.mrb[0].mxu0
  %v173 = vpop.f32.mrb[0].mxu0
  %v174 = vadd.f32 %v57, %v173
  %v175 = vpop.f32.mrb[0].mxu0
  %176 = vmatprep.mubr.bf16.mxu0 0
  %177 = vmatmul.mubr.bf16.gmra.mrb[0].mxu0 %v82
  %v178 = vpop.f32.mrb[0].mxu0
  %v179 = vadd.f32 %v57, %v178
  %v180 = vpop.f32.mrb[0].mxu0
  %v181 = vpop.f32.mrb[0].mxu0
  %v182 = vadd.f32 %v57, %v181
  %v183 = vpop.f32.mrb[0].mxu0
  %184 = vdwg.mxu0
  %v185 = vmax.f32 %v123, 0.0
  %v186 = vmax.f32 %v126, 0.0
  %v187 = vmax.f32 %v131, 0.0
  %v188 = vmax.f32 %v134, 0.0
  %v189 = vmax.f32 %v139, 0.0
  %v190 = vmax.f32 %v142, 0.0
  %v191 = vmax.f32 %v147, 0.0
  %v192 = vmax.f32 %v150, 0.0
  %v193 = vmax.f32 %v155, 0.0
  %v194 = vmax.f32 %v158, 0.0
  %v195 = vmax.f32 %v163, 0.0
  %v196 = vmax.f32 %v166, 0.0
  %v197 = vmax.f32 %v171, 0.0
  %v198 = vmax.f32 %v174, 0.0
  %v199 = vmax.f32 %v179, 0.0
  %v200 = vmax.f32 %v182, 0.0
  %v201 = vpack.c.bf16 %v186, %v185
  %v202 = vpack.c.bf16 %v188, %v187
  %v203 = vpack.c.bf16 %v190, %v189
  %v204 = vpack.c.bf16 %v192, %v191
  %v205 = vpack.c.bf16 %v194, %v193
  %v206 = vpack.c.bf16 %v196, %v195
  %v207 = vpack.c.bf16 %v198, %v197
  %v208 = vpack.c.bf16 %v200, %v199
  %v209 = vld [vmem:[%s3] sm:$0xf]
  %v210 = vld [vmem:[%s3 + $0x4] sm:$0xf]
  %v211 = vld [vmem:[%s3 + $0x8] sm:$0xf]
  %v212 = vld [vmem:[%s3 + $0xc] sm:$0xf]
  %v213 = vld [vmem:[%s3 + $0x10] sm:$0xf]
  %v214 = vld [vmem:[%s3 + $0x14] sm:$0xf]
  %v215 = vld [vmem:[%s3 + $0x18] sm:$0xf]
  %v216 = vld [vmem:[%s3 + $0x1c] sm:$0xf]
  %v217 = vld [vmem:[%s3 + $0x20] sm:$0xf]
  %v218 = vld [vmem:[%s3 + $0x24] sm:$0xf]
  %v219 = vld [vmem:[%s3 + $0x28] sm:$0xf]
  %v220 = vld [vmem:[%s3 + $0x2c] sm:$0xf]
  %v221 = vld [vmem:[%s3 + $0x30] sm:$0xf]
  %v222 = vld [vmem:[%s3 + $0x34] sm:$0xf]
  %v223 = vld [vmem:[%s3 + $0x38] sm:$0xf]
  %v224 = vld [vmem:[%s3 + $0x3c] sm:$0xf]
  %v225 = vld [vmem:[%s4] sm:$0x1]
  %v227 = vlaneseq
  %v228 = vshrl.u32 %v227, 7
  %v229 = vsub.s32 0, %v228
  %v230 = vrot.slane %v225, %v229
  %v248 = vunpack.c.l.b16 %v209
  %v249 = vunpack.c.l.b16 %v210
  %v250 = vunpack.c.l.b16 %v211
  %v251 = vunpack.c.l.b16 %v212
  %v252 = vunpack.c.l.b16 %v213
  %v253 = vunpack.c.l.b16 %v214
  %v254 = vunpack.c.l.b16 %v215
  %v255 = vunpack.c.l.b16 %v216
  %v256 = vunpack.c.l.b16 %v217
  %v257 = vunpack.c.l.b16 %v218
  %v258 = vunpack.c.l.b16 %v219
  %v259 = vunpack.c.l.b16 %v220
  %v260 = vunpack.c.l.b16 %v221
  %v261 = vunpack.c.l.b16 %v222
  %v262 = vunpack.c.l.b16 %v223
  %v263 = vunpack.c.l.b16 %v224
  %v264 = vpack.c.b16 %v249, %v248
  %v265 = vpack.c.b16 %v251, %v250
  %v266 = vpack.c.b16 %v253, %v252
  %v267 = vpack.c.b16 %v255, %v254
  %v268 = vpack.c.b16 %v257, %v256
  %v269 = vpack.c.b16 %v259, %v258
  %v270 = vpack.c.b16 %v261, %v260
  %v271 = vpack.c.b16 %v263, %v262
  %280 = vmatprep.subr.bf16.mxu0 0
  %281 = vmatpush1.bf16.msra.mxu0 %v264
  %282 = vmatprep.subr.bf16.mxu0 0
  %283 = vmatpush1.bf16.msra.mxu0 %v265
  %284 = vmatprep.subr.bf16.mxu0 0
  %285 = vmatpush1.bf16.msra.mxu0 %v266
  %286 = vmatprep.subr.bf16.mxu0 0
  %287 = vmatpush1.bf16.msra.mxu0 %v267
  %288 = vmatprep.subr.bf16.mxu0 0
  %289 = vmatpush1.bf16.msra.mxu0 %v268
  %290 = vmatprep.subr.bf16.mxu0 0
  %291 = vmatpush1.bf16.msra.mxu0 %v269
  %292 = vmatprep.subr.bf16.mxu0 0
  %293 = vmatpush1.bf16.msra.mxu0 %v270
  %294 = vmatprep.subr.bf16.mxu0 0
  %295 = vmatpush1.bf16.msra.mxu0 %v271
  %296 = vmatprep.subr.bf16.mxu0 0
  %297 = vmatpush1.bf16.msra.mxu0 0
  %298 = vmatprep.subr.bf16.mxu0 0
  %299 = vmatpush1.bf16.msra.mxu0 0
  %300 = vmatprep.subr.bf16.mxu0 0
  %301 = vmatpush1.bf16.msra.mxu0 0
  %302 = vmatprep.subr.bf16.mxu0 0
  %303 = vmatpush1.bf16.msra.mxu0 0
  %304 = vmatprep.subr.bf16.mxu0 0
  %305 = vmatpush1.bf16.msra.mxu0 0
  %306 = vmatprep.subr.bf16.mxu0 0
  %307 = vmatpush1.bf16.msra.mxu0 0
  %308 = vmatprep.subr.bf16.mxu0 0
  %309 = vmatpush1.bf16.msra.mxu0 0
  %310 = vmatprep.subr.bf16.mxu0 0
  %311 = vmatpush1.bf16.msra.mxu0 0
  %312 = vmatprep.mubr.bf16.mxu0 0
  %313 = vmatmul.mubr.bf16.gmra.mrb[0].mxu0 %v201
  %v314 = vpop.f32.mrb[0].mxu0
  %v315 = vadd.f32 %v230, %v314
  %v316 = vpop.f32.mrb[0].mxu0
  %v317 = vpop.f32.mrb[0].mxu0
  %v318 = vadd.f32 %v230, %v317
  %v319 = vpop.f32.mrb[0].mxu0
  %320 = vmatprep.mubr.bf16.mxu0 0
  %321 = vmatmul.mubr.bf16.gmra.mrb[0].mxu0 %v202
  %v322 = vpop.f32.mrb[0].mxu0
  %v323 = vadd.f32 %v230, %v322
  %v324 = vpop.f32.mrb[0].mxu0
  %v325 = vpop.f32.mrb[0].mxu0
  %v326 = vadd.f32 %v230, %v325
  %v327 = vpop.f32.mrb[0].mxu0
  %328 = vmatprep.mubr.bf16.mxu0 0
  %329 = vmatmul.mubr.bf16.gmra.mrb[0].mxu0 %v203
  %v330 = vpop.f32.mrb[0].mxu0
  %v331 = vadd.f32 %v230, %v330
  %v332 = vpop.f32.mrb[0].mxu0
  %v333 = vpop.f32.mrb[0].mxu0
  %v334 = vadd.f32 %v230, %v333
  %v335 = vpop.f32.mrb[0].mxu0
  %336 = vmatprep.mubr.bf16.mxu0 0
  %337 = vmatmul.mubr.bf16.gmra.mrb[0].mxu0 %v204
  %v338 = vpop.f32.mrb[0].mxu0
  %v339 = vadd.f32 %v230, %v338
  %v340 = vpop.f32.mrb[0].mxu0
  %v341 = vpop.f32.mrb[0].mxu0
  %v342 = vadd.f32 %v230, %v341
  %v343 = vpop.f32.mrb[0].mxu0
  %344 = vmatprep.mubr.bf16.mxu0 0
  %345 = vmatmul.mubr.bf16.gmra.mrb[0].mxu0 %v205
  %v346 = vpop.f32.mrb[0].mxu0
  %v347 = vadd.f32 %v230, %v346
  %v348 = vpop.f32.mrb[0].mxu0
  %v349 = vpop.f32.mrb[0].mxu0
  %v350 = vadd.f32 %v230, %v349
  %v351 = vpop.f32.mrb[0].mxu0
  %352 = vmatprep.mubr.bf16.mxu0 0
  %353 = vmatmul.mubr.bf16.gmra.mrb[0].mxu0 %v206
  %v354 = vpop.f32.mrb[0].mxu0
  %v355 = vadd.f32 %v230, %v354
  %v356 = vpop.f32.mrb[0].mxu0
  %v357 = vpop.f32.mrb[0].mxu0
  %v358 = vadd.f32 %v230, %v357
  %v359 = vpop.f32.mrb[0].mxu0
  %360 = vmatprep.mubr.bf16.mxu0 0
  %361 = vmatmul.mubr.bf16.gmra.mrb[0].mxu0 %v207
  %v362 = vpop.f32.mrb[0].mxu0
  %v363 = vadd.f32 %v230, %v362
  %v364 = vpop.f32.mrb[0].mxu0
  %v365 = vpop.f32.mrb[0].mxu0
  %v366 = vadd.f32 %v230, %v365
  %v367 = vpop.f32.mrb[0].mxu0
  %368 = vmatprep.mubr.bf16.mxu0 0
  %369 = vmatmul.mubr.bf16.gmra.mrb[0].mxu0 %v208
  %v370 = vpop.f32.mrb[0].mxu0
  %v371 = vadd.f32 %v230, %v370
  %v372 = vpop.f32.mrb[0].mxu0
  %v373 = vpop.f32.mrb[0].mxu0
  %v374 = vadd.f32 %v230, %v373
  %v375 = vpop.f32.mrb[0].mxu0
  %376 = vdwg.mxu0
  %v377 = vmax.f32 %v315, 0.0
  %v378 = vmax.f32 %v318, 0.0
  %v379 = vmax.f32 %v323, 0.0
  %v380 = vmax.f32 %v326, 0.0
  %v381 = vmax.f32 %v331, 0.0
  %v382 = vmax.f32 %v334, 0.0
  %v383 = vmax.f32 %v339, 0.0
  %v384 = vmax.f32 %v342, 0.0
  %v385 = vmax.f32 %v347, 0.0
  %v386 = vmax.f32 %v350, 0.0
  %v387 = vmax.f32 %v355, 0.0
  %v388 = vmax.f32 %v358, 0.0
  %v389 = vmax.f32 %v363, 0.0
  %v390 = vmax.f32 %v366, 0.0
  %v391 = vmax.f32 %v371, 0.0
  %v392 = vmax.f32 %v374, 0.0
  %v393 = vpack.c.bf16 %v378, %v377
  %v394 = vpack.c.bf16 %v380, %v379
  %v395 = vpack.c.bf16 %v382, %v381
  %v396 = vpack.c.bf16 %v384, %v383
  %v397 = vpack.c.bf16 %v386, %v385
  %v398 = vpack.c.bf16 %v388, %v387
  %v399 = vpack.c.bf16 %v390, %v389
  %v400 = vpack.c.bf16 %v392, %v391
  %v401 = vld [vmem:[%s5] sm:$0xf]
  %v402 = vld [vmem:[%s5 + $0x4] sm:$0xf]
  %v403 = vld [vmem:[%s5 + $0x8] sm:$0xf]
  %v404 = vld [vmem:[%s5 + $0xc] sm:$0xf]
  %v405 = vld [vmem:[%s5 + $0x10] sm:$0xf]
  %v406 = vld [vmem:[%s5 + $0x14] sm:$0xf]
  %v407 = vld [vmem:[%s5 + $0x18] sm:$0xf]
  %v408 = vld [vmem:[%s5 + $0x1c] sm:$0xf]
  %v409 = vld [vmem:[%s6] sm:$0x1]
  %v411 = vlaneseq
  %v412 = vshrl.u32 %v411, 7
  %v413 = vsub.s32 0, %v412
  %v414 = vrot.slane %v409, %v413
  %v424 = vunpack.c.l.b16 %v401
  %v425 = vunpack.c.l.b16 %v402
  %v426 = vunpack.c.l.b16 %v403
  %v427 = vunpack.c.l.b16 %v404
  %v428 = vunpack.c.l.b16 %v405
  %v429 = vunpack.c.l.b16 %v406
  %v430 = vunpack.c.l.b16 %v407
  %v431 = vunpack.c.l.b16 %v408
  %v432 = vpack.c.b16 %v425, %v424
  %v433 = vpack.c.b16 %v427, %v426
  %v434 = vpack.c.b16 %v429, %v428
  %v435 = vpack.c.b16 %v431, %v430
  %vm440 = vcmask 523264
  %v442 = vsel %vm440, %v393, 0
  %v445 = vsel %vm440, %v394, 0
  %v448 = vsel %vm440, %v395, 0
  %v451 = vsel %vm440, %v396, 0
  %v454 = vsel %vm440, %v397, 0
  %v457 = vsel %vm440, %v398, 0
  %v460 = vsel %vm440, %v399, 0
  %v463 = vsel %vm440, %v400, 0
  %465 = vmatprep.subr.bf16.mxu0 0
  %466 = vmatpush1.bf16.msra.mxu0 %v432
  %467 = vmatprep.subr.bf16.mxu0 0
  %468 = vmatpush1.bf16.msra.mxu0 %v433
  %469 = vmatprep.subr.bf16.mxu0 0
  %470 = vmatpush1.bf16.msra.mxu0 %v434
  %471 = vmatprep.subr.bf16.mxu0 0
  %472 = vmatpush1.bf16.msra.mxu0 %v435
  %473 = vmatprep.subr.bf16.mxu0 0
  %474 = vmatpush1.bf16.msra.mxu0 0
  %475 = vmatprep.subr.bf16.mxu0 0
  %476 = vmatpush1.bf16.msra.mxu0 0
  %477 = vmatprep.subr.bf16.mxu0 0
  %478 = vmatpush1.bf16.msra.mxu0 0
  %479 = vmatprep.subr.bf16.mxu0 0
  %480 = vmatpush1.bf16.msra.mxu0 0
  %481 = vmatprep.subr.bf16.mxu0 0
  %482 = vmatpush1.bf16.msra.mxu0 0
  %483 = vmatprep.subr.bf16.mxu0 0
  %484 = vmatpush1.bf16.msra.mxu0 0
  %485 = vmatprep.subr.bf16.mxu0 0
  %486 = vmatpush1.bf16.msra.mxu0 0
  %487 = vmatprep.subr.bf16.mxu0 0
  %488 = vmatpush1.bf16.msra.mxu0 0
  %489 = vmatprep.subr.bf16.mxu0 0
  %490 = vmatpush1.bf16.msra.mxu0 0
  %491 = vmatprep.subr.bf16.mxu0 0
  %492 = vmatpush1.bf16.msra.mxu0 0
  %493 = vmatprep.subr.bf16.mxu0 0
  %494 = vmatpush1.bf16.msra.mxu0 0
  %495 = vmatprep.subr.bf16.mxu0 0
  %496 = vmatpush1.bf16.msra.mxu0 0
  %497 = vmatprep.mubr.bf16.mxu0 0
  %498 = vmatmul.mubr.bf16.gmra.mrb[0].mxu0 %v442
  %v499 = vpop.f32.mrb[0].mxu0
  %v500 = vadd.f32 %v414, %v499
  %v501 = vpop.f32.mrb[0].mxu0
  %v502 = vpop.f32.mrb[0].mxu0
  %v503 = vadd.f32 %v414, %v502
  %v504 = vpop.f32.mrb[0].mxu0
  %505 = vmatprep.mubr.bf16.mxu0 0
  %506 = vmatmul.mubr.bf16.gmra.mrb[0].mxu0 %v445
  %v507 = vpop.f32.mrb[0].mxu0
  %v508 = vadd.f32 %v414, %v507
  %v509 = vpop.f32.mrb[0].mxu0
  %v510 = vpop.f32.mrb[0].mxu0
  %v511 = vadd.f32 %v414, %v510
  %v512 = vpop.f32.mrb[0].mxu0
  %513 = vmatprep.mubr.bf16.mxu0 0
  %514 = vmatmul.mubr.bf16.gmra.mrb[0].mxu0 %v448
  %v515 = vpop.f32.mrb[0].mxu0
  %v516 = vadd.f32 %v414, %v515
  %v517 = vpop.f32.mrb[0].mxu0
  %v518 = vpop.f32.mrb[0].mxu0
  %v519 = vadd.f32 %v414, %v518
  %v520 = vpop.f32.mrb[0].mxu0
  %521 = vmatprep.mubr.bf16.mxu0 0
  %522 = vmatmul.mubr.bf16.gmra.mrb[0].mxu0 %v451
  %v523 = vpop.f32.mrb[0].mxu0
  %v524 = vadd.f32 %v414, %v523
  %v525 = vpop.f32.mrb[0].mxu0
  %v526 = vpop.f32.mrb[0].mxu0
  %v527 = vadd.f32 %v414, %v526
  %v528 = vpop.f32.mrb[0].mxu0
  %529 = vmatprep.mubr.bf16.mxu0 0
  %530 = vmatmul.mubr.bf16.gmra.mrb[0].mxu0 %v454
  %v531 = vpop.f32.mrb[0].mxu0
  %v532 = vadd.f32 %v414, %v531
  %v533 = vpop.f32.mrb[0].mxu0
  %v534 = vpop.f32.mrb[0].mxu0
  %v535 = vadd.f32 %v414, %v534
  %v536 = vpop.f32.mrb[0].mxu0
  %537 = vmatprep.mubr.bf16.mxu0 0
  %538 = vmatmul.mubr.bf16.gmra.mrb[0].mxu0 %v457
  %v539 = vpop.f32.mrb[0].mxu0
  %v540 = vadd.f32 %v414, %v539
  %v541 = vpop.f32.mrb[0].mxu0
  %v542 = vpop.f32.mrb[0].mxu0
  %v543 = vadd.f32 %v414, %v542
  %v544 = vpop.f32.mrb[0].mxu0
  %545 = vmatprep.mubr.bf16.mxu0 0
  %546 = vmatmul.mubr.bf16.gmra.mrb[0].mxu0 %v460
  %v547 = vpop.f32.mrb[0].mxu0
  %v548 = vadd.f32 %v414, %v547
  %v549 = vpop.f32.mrb[0].mxu0
  %v550 = vpop.f32.mrb[0].mxu0
  %v551 = vadd.f32 %v414, %v550
  %v552 = vpop.f32.mrb[0].mxu0
  %553 = vmatprep.mubr.bf16.mxu0 0
  %554 = vmatmul.mubr.bf16.gmra.mrb[0].mxu0 %v463
  %v555 = vpop.f32.mrb[0].mxu0
  %v556 = vadd.f32 %v414, %v555
  %v557 = vpop.f32.mrb[0].mxu0
  %v558 = vpop.f32.mrb[0].mxu0
  %v559 = vadd.f32 %v414, %v558
  %v560 = vpop.f32.mrb[0].mxu0
  %561 = vdwg.mxu0
  %562 = vmax.xlane.f32.xlu0 %v500
  %v563 = vpop.xlane.xlu0 %562
  %564 = vmax.xlane.f32.xlu0 %v503
  %v565 = vpop.xlane.xlu0 %564
  %566 = vmax.xlane.f32.xlu0 %v508
  %v567 = vpop.xlane.xlu0 %566
  %568 = vmax.xlane.f32.xlu0 %v511
  %v569 = vpop.xlane.xlu0 %568
  %570 = vmax.xlane.f32.xlu0 %v516
  %v571 = vpop.xlane.xlu0 %570
  %572 = vmax.xlane.f32.xlu0 %v519
  %v573 = vpop.xlane.xlu0 %572
  %574 = vmax.xlane.f32.xlu0 %v524
  %v575 = vpop.xlane.xlu0 %574
  %576 = vmax.xlane.f32.xlu0 %v527
  %v577 = vpop.xlane.xlu0 %576
  %578 = vmax.xlane.f32.xlu0 %v532
  %v579 = vpop.xlane.xlu0 %578
  %580 = vmax.xlane.f32.xlu0 %v535
  %v581 = vpop.xlane.xlu0 %580
  %582 = vmax.xlane.f32.xlu0 %v540
  %v583 = vpop.xlane.xlu0 %582
  %584 = vmax.xlane.f32.xlu0 %v543
  %v585 = vpop.xlane.xlu0 %584
  %586 = vmax.xlane.f32.xlu0 %v548
  %v587 = vpop.xlane.xlu0 %586
  %588 = vmax.xlane.f32.xlu0 %v551
  %v589 = vpop.xlane.xlu0 %588
  %590 = vmax.xlane.f32.xlu0 %v556
  %v591 = vpop.xlane.xlu0 %590
  %592 = vmax.xlane.f32.xlu0 %v559
  %v593 = vpop.xlane.xlu0 %592
  %v594 = vsub.f32 %v500, %v563
  %v595 = vsub.f32 %v503, %v565
  %v596 = vsub.f32 %v508, %v567
  %v597 = vsub.f32 %v511, %v569
  %v598 = vsub.f32 %v516, %v571
  %v599 = vsub.f32 %v519, %v573
  %v600 = vsub.f32 %v524, %v575
  %v601 = vsub.f32 %v527, %v577
  %v602 = vsub.f32 %v532, %v579
  %v603 = vsub.f32 %v535, %v581
  %v604 = vsub.f32 %v540, %v583
  %v605 = vsub.f32 %v543, %v585
  %v606 = vsub.f32 %v548, %v587
  %v607 = vsub.f32 %v551, %v589
  %v608 = vsub.f32 %v556, %v591
  %v609 = vsub.f32 %v559, %v593
  %v610 = vmul.f32 %v594, 1.442695
  %v611 = vpow.pop %v610
  %v612 = vmul.f32 %v595, 1.442695
  %v613 = vpow.pop %v612
  %v614 = vmul.f32 %v596, 1.442695
  %v615 = vpow.pop %v614
  %v616 = vmul.f32 %v597, 1.442695
  %v617 = vpow.pop %v616
  %v618 = vmul.f32 %v598, 1.442695
  %v619 = vpow.pop %v618
  %v620 = vmul.f32 %v599, 1.442695
  %v621 = vpow.pop %v620
  %v622 = vmul.f32 %v600, 1.442695
  %v623 = vpow.pop %v622
  %v624 = vmul.f32 %v601, 1.442695
  %v625 = vpow.pop %v624
  %v626 = vmul.f32 %v602, 1.442695
  %v627 = vpow.pop %v626
  %v628 = vmul.f32 %v603, 1.442695
  %v629 = vpow.pop %v628
  %v630 = vmul.f32 %v604, 1.442695
  %v631 = vpow.pop %v630
  %v632 = vmul.f32 %v605, 1.442695
  %v633 = vpow.pop %v632
  %v634 = vmul.f32 %v606, 1.442695
  %v635 = vpow.pop %v634
  %v636 = vmul.f32 %v607, 1.442695
  %v637 = vpow.pop %v636
  %v638 = vmul.f32 %v608, 1.442695
  %v639 = vpow.pop %v638
  %v640 = vmul.f32 %v609, 1.442695
  %v641 = vpow.pop %v640
  %642 = vadd.xlane.f32.xlu0 %v611
  %v643 = vpop.xlane.xlu0 %642
  %644 = vadd.xlane.f32.xlu0 %v613
  %v645 = vpop.xlane.xlu0 %644
  %646 = vadd.xlane.f32.xlu0 %v615
  %v647 = vpop.xlane.xlu0 %646
  %648 = vadd.xlane.f32.xlu0 %v617
  %v649 = vpop.xlane.xlu0 %648
  %650 = vadd.xlane.f32.xlu0 %v619
  %v651 = vpop.xlane.xlu0 %650
  %652 = vadd.xlane.f32.xlu0 %v621
  %v653 = vpop.xlane.xlu0 %652
  %654 = vadd.xlane.f32.xlu0 %v623
  %v655 = vpop.xlane.xlu0 %654
  %656 = vadd.xlane.f32.xlu0 %v625
  %v657 = vpop.xlane.xlu0 %656
  %658 = vadd.xlane.f32.xlu0 %v627
  %v659 = vpop.xlane.xlu0 %658
  %660 = vadd.xlane.f32.xlu0 %v629
  %v661 = vpop.xlane.xlu0 %660
  %662 = vadd.xlane.f32.xlu0 %v631
  %v663 = vpop.xlane.xlu0 %662
  %664 = vadd.xlane.f32.xlu0 %v633
  %v665 = vpop.xlane.xlu0 %664
  %666 = vadd.xlane.f32.xlu0 %v635
  %v667 = vpop.xlane.xlu0 %666
  %668 = vadd.xlane.f32.xlu0 %v637
  %v669 = vpop.xlane.xlu0 %668
  %670 = vadd.xlane.f32.xlu0 %v639
  %v671 = vpop.xlane.xlu0 %670
  %672 = vadd.xlane.f32.xlu0 %v641
  %v673 = vpop.xlane.xlu0 %672
  %v674 = vrcp.pop %v643
  %v675 = vrcp.pop %v645
  %v676 = vrcp.pop %v647
  %v677 = vrcp.pop %v649
  %v678 = vrcp.pop %v651
  %v679 = vrcp.pop %v653
  %v680 = vrcp.pop %v655
  %v681 = vrcp.pop %v657
  %v682 = vrcp.pop %v659
  %v683 = vrcp.pop %v661
  %v684 = vrcp.pop %v663
  %v685 = vrcp.pop %v665
  %v686 = vrcp.pop %v667
  %v687 = vrcp.pop %v669
  %v688 = vrcp.pop %v671
  %v689 = vrcp.pop %v673
  %v690 = vmul.f32 %v611, %v674
  %v691 = vmul.f32 %v613, %v675
  %v692 = vmul.f32 %v615, %v676
  %v693 = vmul.f32 %v617, %v677
  %v694 = vmul.f32 %v619, %v678
  %v695 = vmul.f32 %v621, %v679
  %v696 = vmul.f32 %v623, %v680
  %v697 = vmul.f32 %v625, %v681
  %v698 = vmul.f32 %v627, %v682
  %v699 = vmul.f32 %v629, %v683
  %v700 = vmul.f32 %v631, %v684
  %v701 = vmul.f32 %v633, %v685
  %v702 = vmul.f32 %v635, %v686
  %v703 = vmul.f32 %v637, %v687
  %v704 = vmul.f32 %v639, %v688
  %v705 = vmul.f32 %v641, %v689
  %vm706 = vcmask 56320
  %707 = vst.msk [vmem:[%s7] sm:$0xff] %vm706, %v690
  %708 = vst.msk [vmem:[%s7 + $0x8] sm:$0xff] %vm706, %v691
  %709 = vst.msk [vmem:[%s7 + $0x10] sm:$0xff] %vm706, %v692
  %710 = vst.msk [vmem:[%s7 + $0x18] sm:$0xff] %vm706, %v693
  %711 = vst.msk [vmem:[%s7 + $0x20] sm:$0xff] %vm706, %v694
  %712 = vst.msk [vmem:[%s7 + $0x28] sm:$0xff] %vm706, %v695
  %713 = vst.msk [vmem:[%s7 + $0x30] sm:$0xff] %vm706, %v696
  %714 = vst.msk [vmem:[%s7 + $0x38] sm:$0xff] %vm706, %v697
  %715 = vst.msk [vmem:[%s7 + $0x40] sm:$0xff] %vm706, %v698
  %716 = vst.msk [vmem:[%s7 + $0x48] sm:$0xff] %vm706, %v699
  %717 = vst.msk [vmem:[%s7 + $0x50] sm:$0xff] %vm706, %v700
  %718 = vst.msk [vmem:[%s7 + $0x58] sm:$0xff] %vm706, %v701
  %719 = vst.msk [vmem:[%s7 + $0x60] sm:$0xff] %vm706, %v702
  %720 = vst.msk [vmem:[%s7 + $0x68] sm:$0xff] %vm706, %v703
  %721 = vst.msk [vmem:[%s7 + $0x70] sm:$0xff] %vm706, %v704
  %722 = vst.msk [vmem:[%s7 + $0x78] sm:$0xff] %vm706, %v705
  // Predicated region
  $region30: #{tpu_custom_call.1} parent=0 // pred_check
    _
  $region31: #{tpu_custom_call.1} parent=0 // pred_check_branch
    %724 = sbr.rel (0) target = $region33
  $region32: #{tpu_custom_call.1} parent=0 // pred_region
    _
  $region33: #{tpu_custom_call.1} parent=0 // pred_fallthru
    _
  // Predicated region
  $region34: #{tpu_custom_call.1} parent=0 // pred_check
    _
  $region35: #{tpu_custom_call.1} parent=0 // pred_check_branch
    %726 = sbr.rel (0) target = $region37
  $region36: #{tpu_custom_call.1} parent=0 // pred_region
    _
  $region37: #{tpu_custom_call.1} parent=0 // pred_fallthru
    _

</llo_original>
